<compile_context>
chip_gen: v5e
topology: v5e:2x2
jax: 0.10.0
libtpu: 0.0.40
codegen_flags: <defaults>
</compile_context>

<pallas_src>
import jax
import jax.numpy as jnp
from jax.experimental import pallas as pl
from jax.experimental.pallas import tpu as pltpu


def _fused_head_kernel(x_ref, w_ref, b_ref, o_ref):
    # x_ref: (C_in, TM)     pixel tile in NCHW orientation (no host transpose)
    # w_ref: (C_in, N_pad)  fused [cls | reg] weights, VMEM-resident
    # b_ref: (1, N_pad)     fused bias
    # o_ref: (TM, N_pad)    lane-dense output tile
    acc = jax.lax.dot_general(
        x_ref[...], w_ref[...],
        dimension_numbers=(((0,), (0,)), ((), ())),   # contract over C_in
        preferred_element_type=jnp.float32,
    )
    o_ref[...] = (acc + b_ref[...]).astype(o_ref.dtype)


def prediction_head(x_nchw, params, num_classes, num_anchors, *, tm=None):
    """x_nchw: (B, C_in, H, W) float32. Returns (class_logits, box_regression)."""
    w_cls, b_cls, w_reg, b_reg = params  # w_*: (C_out, C_in), b_*: (C_out,)
    B, C, H, W = x_nchw.shape
    hw = H * W
    cls_out = num_classes * num_anchors
    reg_out = num_anchors * 4
    n_fused = cls_out + reg_out
    n_pad = pl.cdiv(n_fused, 128) * 128          # lane-dense fused output width

    # Pixel-tile size: large tiles for real SSD maps, 128 for small ones.
    if tm is None:
        tm = 512 if hw >= 512 else 128
    hw_pad = pl.cdiv(hw, tm) * tm

    # Fused, transposed weights (C_in, N_pad); zero-pad extra output lanes.
    w_fused = jnp.concatenate([w_cls.T, w_reg.T], axis=1)        # (C, n_fused)
    w_fused = jnp.pad(w_fused, ((0, 0), (0, n_pad - n_fused)))
    b_fused = jnp.concatenate([b_cls, b_reg], axis=0)
    b_fused = jnp.pad(b_fused, (0, n_pad - n_fused)).reshape(1, n_pad)

    # NCHW -> (B, C, H*W) is a free view of contiguous memory (no transpose).
    x3d = x_nchw.reshape(B, C, hw)
    if hw_pad != hw:
        x3d = jnp.pad(x3d, ((0, 0), (0, 0), (0, hw_pad - hw)))

    grid = (B, hw_pad // tm)

    # VMEM budget: double-buffered x & out tiles + resident weights/bias (+headroom).
    est = 2 * (C * tm + tm * n_pad) * 4 + (C * n_pad + n_pad) * 4
    vmem_bytes = min(max(4 * est, 16 * 1024 * 1024), 64 * 1024 * 1024)

    out = pl.pallas_call(
        _fused_head_kernel,
        out_shape=jax.ShapeDtypeStruct((B, hw_pad, n_pad), x_nchw.dtype),
        grid=grid,
        in_specs=[
            pl.BlockSpec((None, C, tm), lambda b, j: (b, 0, j)),   # x tile
            pl.BlockSpec((C, n_pad), lambda b, j: (0, 0)),         # weights (resident)
            pl.BlockSpec((1, n_pad), lambda b, j: (0, 0)),         # bias (resident)
        ],
        out_specs=pl.BlockSpec((None, tm, n_pad), lambda b, j: (b, j, 0)),
        compiler_params=pltpu.CompilerParams(
            dimension_semantics=("parallel", "parallel"),
            vmem_limit_bytes=vmem_bytes,
        ),
    )(x3d, w_fused, b_fused)

    # Drop padding, split heads, and reshape exactly like the PyTorch module.
    out = out[:, :hw, :]
    cls2d = out[..., :cls_out]                     # (B, H*W, num_anchors*num_classes)
    reg2d = out[..., cls_out:n_fused]              # (B, H*W, num_anchors*4)
    class_logits = cls2d.reshape(B, hw * num_anchors, num_classes)
    box_regression = reg2d.reshape(B, hw * num_anchors, 4)
    return class_logits, box_regression


def init_params(key, in_channels, num_classes, num_anchors):
    cls_out = num_classes * num_anchors
    reg_out = num_anchors * 4
    k1, k2, k3, k4 = jax.random.split(key, 4)
    w_cls = jax.random.normal(k1, (cls_out, in_channels), jnp.float32) * 0.05
    b_cls = jax.random.normal(k2, (cls_out,), jnp.float32) * 0.05
    w_reg = jax.random.normal(k3, (reg_out, in_channels), jnp.float32) * 0.05
    b_reg = jax.random.normal(k4, (reg_out,), jnp.float32) * 0.05
    return w_cls, b_cls, w_reg, b_reg


if __name__ == "__main__":
    # Small shapes consistent with the module's forward pass.
    # H*W = 256 -> two 128-row pixel tiles per batch, so the grid is exercised.
    B, C_in, H, W = 2, 16, 16, 16
    num_classes, num_anchors = 8, 4

    key = jax.random.PRNGKey(0)
    kx, kp = jax.random.split(key)
    x = jax.random.normal(kx, (B, C_in, H, W), jnp.float32)
    params = init_params(kp, C_in, num_classes, num_anchors)

    cls_logits, box_reg = prediction_head(x, params, num_classes, num_anchors)
    jax.block_until_ready((cls_logits, box_reg))

    # Pure-JAX reference (1x1 conv == per-pixel matmul), full-precision.
    w_cls, b_cls, w_reg, b_reg = params
    x_nhwc = jnp.transpose(x, (0, 2, 3, 1))
    ref_cls = (jnp.einsum("bhwc,oc->bhwo", x_nhwc, w_cls,
                          precision=jax.lax.Precision.HIGHEST) + b_cls
               ).reshape(B, -1, num_classes)
    ref_reg = (jnp.einsum("bhwc,oc->bhwo", x_nhwc, w_reg,
                          precision=jax.lax.Precision.HIGHEST) + b_reg
               ).reshape(B, -1, 4)

    assert cls_logits.shape == (B, H * W * num_anchors, num_classes)
    assert box_reg.shape == (B, H * W * num_anchors, 4)
    assert jnp.allclose(cls_logits, ref_cls, atol=1e-4, rtol=1e-4)
    assert jnp.allclose(box_reg, ref_reg, atol=1e-4, rtol=1e-4)

    print("KERNEL_OK")
</pallas_src>

<mosaic_0001>
module attributes {stable_mosaic.version = 11 : i64} {
  func.func @_fused_head_kernel(%arg0: i32, %arg1: i32, %arg2: memref<1x16x128xf32, #tpu.memory_space<vmem>>, %arg3: memref<16x128xf32, #tpu.memory_space<vmem>>, %arg4: memref<1x128xf32, #tpu.memory_space<vmem>>, %arg5: memref<1x128x128xf32, #tpu.memory_space<vmem>>) attributes {dimension_semantics = [#tpu.dimension_semantics<parallel>, #tpu.dimension_semantics<parallel>], iteration_bounds = array<i64: 2, 2>, scalar_prefetch = 0 : i64, scratch_operands = 0 : i64, tpu.core_type = #tpu.core_type<tc>, window_params = [{transform_indices = @transform_0, window_bounds = array<i64: 1, 16, 128>}, {pipeline_mode = #tpu.pipeline_mode<synchronous>, transform_indices = @transform_1, window_bounds = array<i64: 16, 128>}, {pipeline_mode = #tpu.pipeline_mode<synchronous>, transform_indices = @transform_2, window_bounds = array<i64: 1, 128>}, {transform_indices = @transform_3, window_bounds = array<i64: 1, 128, 128>}]} {
    %c0 = arith.constant 0 : index
    %c0_0 = arith.constant 0 : index
    %c0_1 = arith.constant 0 : index
    %0 = vector.load %arg2[%c0, %c0_0, %c0_1] : memref<1x16x128xf32, #tpu.memory_space<vmem>>, vector<1x16x128xf32>
    %1 = vector.shape_cast %0 : vector<1x16x128xf32> to vector<16x128xf32>
    %c0_2 = arith.constant 0 : index
    %c0_3 = arith.constant 0 : index
    %2 = vector.load %arg3[%c0_2, %c0_3] : memref<16x128xf32, #tpu.memory_space<vmem>>, vector<16x128xf32>
    %cst = arith.constant dense<0.000000e+00> : vector<128x128xf32>
    %3 = tpu.matmul %1, %2, %cst {dimension_numbers = #tpu.dot_dimension_numbers<[0], [0], [1], [1], [0, 1, 1, 1], [], []>} : vector<16x128xf32>, vector<16x128xf32>, vector<128x128xf32> -> vector<128x128xf32>
    %c0_4 = arith.constant 0 : index
    %c0_5 = arith.constant 0 : index
    %4 = vector.load %arg4[%c0_4, %c0_5] : memref<1x128xf32, #tpu.memory_space<vmem>>, vector<1x128xf32>
    %5 = vector.broadcast %4 : vector<1x128xf32> to vector<128x128xf32>
    %6 = arith.addf %3, %5 : vector<128x128xf32>
    %c0_6 = arith.constant 0 : index
    %c0_7 = arith.constant 0 : index
    %c0_8 = arith.constant 0 : index
    %7 = vector.load %arg5[%c0_6, %c0_7, %c0_8] : memref<1x128x128xf32, #tpu.memory_space<vmem>>, vector<1x128x128xf32>
    %8 = vector.shape_cast %7 : vector<1x128x128xf32> to vector<128x128xf32>
    %9 = vector.shape_cast %6 : vector<128x128xf32> to vector<1x128x128xf32>
    tpu.vector_store %arg5[%c0_6, %c0_7, %c0_8], %9 {strides = array<i32>} : memref<1x128x128xf32, #tpu.memory_space<vmem>>, vector<1x128x128xf32>,
    return
  }
  func.func @transform_0(%arg0: i32, %arg1: i32) -> (i32, i32, i32) {
    %c0_i32 = arith.constant 0 : i32
    %c0_i32_0 = arith.constant 0 : i32
    return %arg0, %c0_i32, %arg1 : i32, i32, i32
  }
  func.func @transform_1(%arg0: i32, %arg1: i32) -> (i32, i32) {
    %c0_i32 = arith.constant 0 : i32
    %c0_i32_0 = arith.constant 0 : i32
    %c0_i32_1 = arith.constant 0 : i32
    return %c0_i32, %c0_i32_0 : i32, i32
  }
  func.func @transform_2(%arg0: i32, %arg1: i32) -> (i32, i32) {
    %c0_i32 = arith.constant 0 : i32
    %c0_i32_0 = arith.constant 0 : i32
    %c0_i32_1 = arith.constant 0 : i32
    return %c0_i32, %c0_i32_0 : i32, i32
  }
  func.func @transform_3(%arg0: i32, %arg1: i32) -> (i32, i32, i32) {
    %c0_i32 = arith.constant 0 : i32
    %c0_i32_0 = arith.constant 0 : i32
    return %arg0, %arg1, %c0_i32 : i32, i32, i32
  }
}

</mosaic_0001>

<llo_original>
// kernel: tpu_custom_call.1
$region0: #{tpu_custom_call.1}
  #allocation0 [shape = 'u32[]', space=smem, size = 0x4, offset = 0x4, fixed_abs, tag = 'smem constant byte address 0x4 - core index']
  #allocation1 [shape = 'u32[72,128]{1,0:T(1,128)}', space=vmem, size = 0x9000, scoped, tag = 'internal scratch']
  %s0 = inlined_call_operand.hbm [shape: f32[2,16,256], index: 0, kind: input, shape index: {}]
  %s1 = inlined_call_operand.hbm [shape: f32[16,128], index: 1, kind: input, shape index: {}]
  %s2 = inlined_call_operand.vmem [shape: f32[1,128], index: 2, kind: input, shape index: {}]
  %s3 = inlined_call_operand.hbm [shape: f32[2,256,128], index: 3, kind: output, shape index: {}]
  %s4 = sld [smem:[#allocation0]]
  $region53: #{tpu_custom_call.1} parent=0
    _
  %s6 = ssub.s32 1, %s4
  %s7 = scalar_select 0, %s6, %s4
  $region1: #{tpu_custom_call.1} parent=0
    #allocation2 [shape = 'u8[16384]{0}', space=vmem, size = 0x4000, scoped, tag = 'input window, operand 0']
    #allocation3 [shape = 's32[2]{0}', space=sflag, size = 0x8, scoped, tag = 'scoped memory for tpu_custom_call.1']
    #allocation4 [shape = 's32[2]{0}', space=sflag, size = 0x8, scoped, tag = 'scoped memory for tpu_custom_call.1']
    #allocation5 [shape = 'u8[8192]{0}', space=vmem, size = 0x2000, scoped, tag = 'input window, operand 1, single buffered']
    #allocation6 [shape = 's32[1]{0}', space=sflag, size = 0x4, scoped, tag = 'scoped memory for tpu_custom_call.1']
    #allocation7 [shape = 'u8[131072]{0}', space=vmem, size = 0x20000, scoped, tag = 'output window, operand 0']
    %8 = vsyncpa [#allocation3], 0
    %s9 = scalar_lea.sflag [#allocation3], 1
    %10 = vsyncpa %s9, 0
    %11 = vsyncpa [#allocation6], 0
    %12 = vsyncpa [#allocation4], 0
    %s13 = scalar_lea.sflag [#allocation4], 1
    %14 = vsyncpa %s13, 0
    loop: start=0, step=1, limit=6
    $region2: #{tpu_custom_call.1} parent=1 // loop_pre_header
      _
    $region3: #{tpu_custom_call.1} parent=1 // loop_header
      %s16 = sphi 0, %s20
      %p17 = scmp.ge.s32.totalorder %s16, 6
      %s23 = sphi 0, %s35
      %s24 = sphi 0, %s31
      %s25 = sphi 0, %s23
      %s26 = sphi 0, %s24
      %s27 = sphi 0, %s25
      %s28 = sphi 0, %s26
      %s40 = sphi 0, %s42
      %s43 = sphi 0, %s40
      %s44 = sphi 0, %s43
      %s60 = sphi 0, %s44
      %s64 = sphi 0, %s64
      %s66 = sphi 0, %s64
      %s67 = sphi 0, %s66
      %s81 = sphi 0, %s67
      %s85 = sphi 0, %s85
      %s87 = sphi 0, %s85
      %s88 = sphi 0, %s87
      %s102 = sphi 0, %s88
      %s110 = sphi 0, %s112
      %s113 = sphi 0, %s110
      %s114 = sphi 0, %s113
      %s130 = sphi 0, %s114
    $region4: #{tpu_custom_call.1} parent=1 // loop_header_branch
      %19 = sbr.rel (%p17) target = $region8
    $region5: #{tpu_custom_call.1} parent=1 // loop_body
      %s21 = ssub.s32 %s16, 1
      %s22 = ssub.s32 %s16, 2
      %s29 = sadd.s32 1, %s24
      %p30 = scmp.ge.s32.totalorder %s29, 2
      %s31 = scalar_select %p30, 0, %s29
      %s32 = sadd.s32 1, %s23
      %s33 = scalar_select %p30, %s32, %s23
      %p34 = scmp.ge.s32.totalorder %s33, 2
      %s35 = scalar_select %p34, 0, %s33
      %s36 = ssub.s32 %s23, %s35
      %s37 = ssub.s32 %s24, %s31
      %s38 = sor.u32 %s36, %s37
      %p39 = scmp.eq.s32.totalorder %s38, 0
      %s41 = sadd.s32 %s40, 1
      %s42 = scalar_select %p39, %s40, %s41
      %p45 = pneg %p39
      %p46 = scmp.eq.s32.totalorder %s16, 3
      %p47 = por %p45, %p46
      %p48 = scmp.ne.s32.totalorder %s40, %s43
      %p49 = scmp.eq.s32.totalorder %s16, 0
      %p50 = por %p48, %p49
      %p51 = scmp.ne.s32.totalorder %s40, %s43
      %p52 = scmp.eq.s32.totalorder %s21, 3
      %p53 = por %p51, %p52
      %p54 = scmp.ne.s32.totalorder %s43, %s44
      %p55 = scmp.eq.s32.totalorder %s21, 0
      %p56 = por %p54, %p55
      %p57 = scmp.ne.s32.totalorder %s43, %s44
      %p58 = scmp.eq.s32.totalorder %s22, 3
      %p59 = por %p57, %p58
      %p61 = scmp.ne.s32.totalorder %s44, %s60
      %p62 = scmp.eq.s32.totalorder %s22, 0
      %p63 = por %p61, %p62
      %s65 = sadd.s32 %s64, 1
      %p68 = scmp.eq.s32.totalorder %s16, 3
      %p69 = scmp.ne.s32.totalorder %s64, %s66
      %p70 = scmp.eq.s32.totalorder %s16, 0
      %p71 = por %p69, %p70
      %p72 = scmp.ne.s32.totalorder %s64, %s66
      %p73 = scmp.eq.s32.totalorder %s21, 3
      %p74 = por %p72, %p73
      %p75 = scmp.ne.s32.totalorder %s66, %s67
      %p76 = scmp.eq.s32.totalorder %s21, 0
      %p77 = por %p75, %p76
      %p78 = scmp.ne.s32.totalorder %s66, %s67
      %p79 = scmp.eq.s32.totalorder %s22, 3
      %p80 = por %p78, %p79
      %p82 = scmp.ne.s32.totalorder %s67, %s81
      %p83 = scmp.eq.s32.totalorder %s22, 0
      %p84 = por %p82, %p83
      %s86 = sadd.s32 %s85, 1
      %p89 = scmp.eq.s32.totalorder %s16, 3
      %p90 = scmp.ne.s32.totalorder %s85, %s87
      %p91 = scmp.eq.s32.totalorder %s16, 0
      %p92 = por %p90, %p91
      %p93 = scmp.ne.s32.totalorder %s85, %s87
      %p94 = scmp.eq.s32.totalorder %s21, 3
      %p95 = por %p93, %p94
      %p96 = scmp.ne.s32.totalorder %s87, %s88
      %p97 = scmp.eq.s32.totalorder %s21, 0
      %p98 = por %p96, %p97
      %p99 = scmp.ne.s32.totalorder %s87, %s88
      %p100 = scmp.eq.s32.totalorder %s22, 3
      %p101 = por %p99, %p100
      %p103 = scmp.ne.s32.totalorder %s88, %s102
      %p104 = scmp.eq.s32.totalorder %s22, 0
      %p105 = por %p103, %p104
      %s106 = ssub.s32 %s23, %s35
      %s107 = ssub.s32 %s24, %s31
      %s108 = sor.u32 %s106, %s107
      %p109 = scmp.eq.s32.totalorder %s108, 0
      %s111 = sadd.s32 %s110, 1
      %s112 = scalar_select %p109, %s110, %s111
      %p115 = pneg %p109
      %p116 = scmp.eq.s32.totalorder %s16, 3
      %p117 = por %p115, %p116
      %p118 = scmp.ne.s32.totalorder %s110, %s113
      %p119 = scmp.eq.s32.totalorder %s16, 0
      %p120 = por %p118, %p119
      %p121 = scmp.ne.s32.totalorder %s110, %s113
      %p122 = scmp.eq.s32.totalorder %s21, 3
      %p123 = por %p121, %p122
      %p124 = scmp.ne.s32.totalorder %s113, %s114
      %p125 = scmp.eq.s32.totalorder %s21, 0
      %p126 = por %p124, %p125
      %p127 = scmp.ne.s32.totalorder %s113, %s114
      %p128 = scmp.eq.s32.totalorder %s22, 3
      %p129 = por %p127, %p128
      %p131 = scmp.ne.s32.totalorder %s114, %s130
      %p132 = scmp.eq.s32.totalorder %s22, 0
      %p133 = por %p131, %p132
      %p134 = scmp.le.s32.totalorder 1, %s16
      %p135 = scmp.lt.s32.totalorder %s16, 5
      %p136 = pnand %p134, %p135
      %p137 = pneg %p136
      // Predicated region
      $region9: #{tpu_custom_call.1} parent=5 // pred_check
        _
      $region10: #{tpu_custom_call.1} parent=5 // pred_check_branch
        %139 = sbr.rel (%p136) target = $region12
      $region11: #{tpu_custom_call.1} parent=5 // pred_region
        %s140 = ssub.s32 %s16, 1
        // Predicated region
        $region13: #{tpu_custom_call.1} parent=11 // pred_check
          %p141 = pneg %p77
        $region14: #{tpu_custom_call.1} parent=11 // pred_check_branch
          %143 = sbr.rel (%p141) target = $region16
        $region15: #{tpu_custom_call.1} parent=11 // pred_region
          %145 = vsyncadd [#allocation6], 0
          %s146 = sshll.u32 %s1, 4
          %s147 = int_to_ptr.hbm [resolvable:$true] %s146
          %s148 = sshll.u32 [#allocation5], 4
          %s149 = int_to_ptr.vmem [resolvable:$true] %s148
          %154 = dma.hbm_to_vmem [thread:$0]  %s147, 256, %s149, [#allocation6], 128, 128, 8
        $region16: #{tpu_custom_call.1} parent=11 // pred_fallthru
          _
        // Predicated region
        $region17: #{tpu_custom_call.1} parent=11 // pred_check
          %p155 = pneg %p98
        $region18: #{tpu_custom_call.1} parent=11 // pred_check_branch
          %157 = sbr.rel (%p155) target = $region20
        $region19: #{tpu_custom_call.1} parent=11 // pred_region
          _
        $region20: #{tpu_custom_call.1} parent=11 // pred_fallthru
          _
      $region12: #{tpu_custom_call.1} parent=5 // pred_fallthru
        _
      %p158 = scmp.lt.s32.totalorder %s16, 4
      // Predicated region
      $region21: #{tpu_custom_call.1} parent=5 // pred_check
        %p159 = pneg %p158
      $region22: #{tpu_custom_call.1} parent=5 // pred_check_branch
        %161 = sbr.rel (%p159) target = $region24
      $region23: #{tpu_custom_call.1} parent=5 // pred_region
        // Predicated region
        $region25: #{tpu_custom_call.1} parent=23 // pred_check
          %p162 = pneg %p50
        $region26: #{tpu_custom_call.1} parent=23 // pred_check_branch
          %164 = sbr.rel (%p162) target = $region28
        $region27: #{tpu_custom_call.1} parent=23 // pred_region
          %s165 = sand.u32 %s40, 1
          %s166 = scalar_lea.sflag [#allocation3], %s165
          %s167 = sand.u32 %s40, 1
          %s168 = smul.addr %s167, 16
          %s169 = scalar_lea.vmem [#allocation2], %s168
          %171 = vsyncadd %s166, 0
          %s172 = smul.addr %s23, 4
          %s173 = sadd.s32 %s24, %s172
          %s174 = smul.addr %s173, 8
          %s175 = scalar_lea.hbm %s0, %s174
          %s176 = sshll.u32 %s175, 4
          %s177 = int_to_ptr.hbm [resolvable:$true] %s176
          %s178 = sshll.u32 %s169, 4
          %s179 = int_to_ptr.vmem [resolvable:$true] %s178
          %184 = dma.hbm_to_vmem [thread:$0]  %s177, 256, %s179, %s166, 256, 128, 8
        $region28: #{tpu_custom_call.1} parent=23 // pred_fallthru
          _
      $region24: #{tpu_custom_call.1} parent=5 // pred_fallthru
        _
      %p185 = scmp.le.s32.totalorder 1, %s16
      %p186 = scmp.lt.s32.totalorder %s16, 5
      %p187 = pnand %p185, %p186
      %p188 = pneg %p187
      // Predicated region
      $region29: #{tpu_custom_call.1} parent=5 // pred_check
        _
      $region30: #{tpu_custom_call.1} parent=5 // pred_check_branch
        %190 = sbr.rel (%p187) target = $region32
      $region31: #{tpu_custom_call.1} parent=5 // pred_region
        %s191 = ssub.s32 %s16, 1
        %s192 = sand.u32 %s43, 1
        %s193 = scalar_lea.sflag [#allocation3], %s192
        %s194 = sand.u32 %s43, 1
        %s195 = smul.addr %s194, 16
        %s196 = scalar_lea.vmem [#allocation2], %s195
        // Predicated region
        $region33: #{tpu_custom_call.1} parent=31 // pred_check
          %p197 = pneg %p56
        $region34: #{tpu_custom_call.1} parent=31 // pred_check_branch
          %199 = sbr.rel (%p197) target = $region36
        $region35: #{tpu_custom_call.1} parent=31 // pred_region
          %201 = dma.done %s193, 256
        $region36: #{tpu_custom_call.1} parent=31 // pred_fallthru
          _
        // Predicated region
        $region37: #{tpu_custom_call.1} parent=31 // pred_check
          %p202 = pneg %p77
        $region38: #{tpu_custom_call.1} parent=31 // pred_check_branch
          %204 = sbr.rel (%p202) target = $region40
        $region39: #{tpu_custom_call.1} parent=31 // pred_region
          %206 = dma.done [#allocation6], 256
        $region40: #{tpu_custom_call.1} parent=31 // pred_fallthru
          _
        %s207 = sand.u32 %s43, 1
        %s208 = scalar_lea.sflag [#allocation3], %s207
        %s209 = sand.u32 %s43, 1
        %s210 = smul.addr %s209, 16
        %s211 = scalar_lea.vmem [#allocation2], %s210
        %p212 = pneg %p56
        %p213 = pneg %p53
        %p214 = pneg %p77
        %p215 = pneg %p74
        %p216 = pneg %p98
        %p217 = pneg %p95
        %p218 = pneg %p126
        %p219 = pneg %p123
        %s220 = sand.u32 %s113, 1
        %s221 = scalar_lea.sflag [#allocation4], %s220
        %s222 = sand.u32 %s113, 1
        %s223 = smul.addr %s222, 128
        %s224 = scalar_lea.vmem [#allocation7], %s223
        %s225 = smul.u32 16, %s26
        %v226 = vld [vmem:[%s196] sm:$0xff]
        %v227 = vld [vmem:[%s196 + $0x8] sm:$0xff]
        %v228 = vld [vmem:[#allocation5] sm:$0xff]
        %v229 = vld [vmem:[#allocation5 + $0x8] sm:$0xff]
        %v230 = vld [vmem:[%s2] sm:$0x1]
        %v232 = vperm.slane %v230, 0
        %234 = vxpose.xlu0.b32.start [1/16] %v226, 128
        %235 = vxpose.xlu0.b32.cont [2/16] %v227, 128
        %236 = vxpose.xlu0.b32.cont [3/16] 0.0, 128
        %237 = vxpose.xlu0.b32.cont [4/16] 0.0, 128
        %238 = vxpose.xlu0.b32.cont [5/16] 0.0, 128
        %239 = vxpose.xlu0.b32.cont [6/16] 0.0, 128
        %240 = vxpose.xlu0.b32.cont [7/16] 0.0, 128
        %241 = vxpose.xlu0.b32.cont [8/16] 0.0, 128
        %242 = vxpose.xlu0.b32.cont [9/16] 0.0, 128
        %243 = vxpose.xlu0.b32.cont [10/16] 0.0, 128
        %244 = vxpose.xlu0.b32.cont [11/16] 0.0, 128
        %245 = vxpose.xlu0.b32.cont [12/16] 0.0, 128
        %246 = vxpose.xlu0.b32.cont [13/16] 0.0, 128
        %247 = vxpose.xlu0.b32.cont [14/16] 0.0, 128
        %248 = vxpose.xlu0.b32.cont [15/16] 0.0, 128
        %249 = vxpose.xlu0.b32.end [16/16] 0.0, 128
        %v250 = vpop.trf.xlu0
        %v251 = vpop.trf.xlu0
        %v252 = vpop.trf.xlu0
        %v253 = vpop.trf.xlu0
        %v254 = vpop.trf.xlu0
        %v255 = vpop.trf.xlu0
        %v256 = vpop.trf.xlu0
        %v257 = vpop.trf.xlu0
        %v258 = vpop.trf.xlu0
        %v259 = vpop.trf.xlu0
        %v260 = vpop.trf.xlu0
        %v261 = vpop.trf.xlu0
        %v262 = vpop.trf.xlu0
        %v263 = vpop.trf.xlu0
        %v264 = vpop.trf.xlu0
        %v265 = vpop.trf.xlu0
        %vm266 = vcmask 130048
        %v268 = vsel %vm266, %v250, 0
        %v271 = vsel %vm266, %v251, 0
        %v274 = vsel %vm266, %v252, 0
        %v277 = vsel %vm266, %v253, 0
        %v280 = vsel %vm266, %v254, 0
        %v283 = vsel %vm266, %v255, 0
        %v286 = vsel %vm266, %v256, 0
        %v289 = vsel %vm266, %v257, 0
        %v292 = vsel %vm266, %v258, 0
        %v295 = vsel %vm266, %v259, 0
        %v298 = vsel %vm266, %v260, 0
        %v301 = vsel %vm266, %v261, 0
        %v304 = vsel %vm266, %v262, 0
        %v307 = vsel %vm266, %v263, 0
        %v310 = vsel %vm266, %v264, 0
        %v313 = vsel %vm266, %v265, 0
        %315 = vmatpush.msra.mxu0 0.0
        %316 = vmatpush.msra.mxu0 0.0
        %317 = vmatpush.msra.mxu0 0.0
        %318 = vmatpush.msra.mxu0 0.0
        %319 = vmatpush.msra.mxu0 0.0
        %320 = vmatpush.msra.mxu0 0.0
        %321 = vmatpush.msra.mxu0 0.0
        %322 = vmatpush.msra.mxu0 0.0
        %323 = vmatpush.msra.mxu0 0.0
        %324 = vmatpush.msra.mxu0 0.0
        %325 = vmatpush.msra.mxu0 0.0
        %326 = vmatpush.msra.mxu0 0.0
        %327 = vmatpush.msra.mxu0 0.0
        %328 = vmatpush.msra.mxu0 0.0
        %329 = vmatpush.msra.mxu0 %v229
        %330 = vmatpush.msra.mxu0 %v228
        %331 = vmatmul.f32.gmra.mxu0 %v268
        %v332 = vpop.f32.mrf.mxu0
        %v333 = vadd.f32 %v232, %v332
        %334 = vmatmul.f32.gmra.mxu0 %v271
        %v335 = vpop.f32.mrf.mxu0
        %v336 = vadd.f32 %v232, %v335
        %337 = vmatmul.f32.gmra.mxu0 %v274
        %v338 = vpop.f32.mrf.mxu0
        %v339 = vadd.f32 %v232, %v338
        %340 = vmatmul.f32.gmra.mxu0 %v277
        %v341 = vpop.f32.mrf.mxu0
        %v342 = vadd.f32 %v232, %v341
        %343 = vmatmul.f32.gmra.mxu0 %v280
        %v344 = vpop.f32.mrf.mxu0
        %v345 = vadd.f32 %v232, %v344
        %346 = vmatmul.f32.gmra.mxu0 %v283
        %v347 = vpop.f32.mrf.mxu0
        %v348 = vadd.f32 %v232, %v347
        %349 = vmatmul.f32.gmra.mxu0 %v286
        %v350 = vpop.f32.mrf.mxu0
        %v351 = vadd.f32 %v232, %v350
        %352 = vmatmul.f32.gmra.mxu0 %v289
        %v353 = vpop.f32.mrf.mxu0
        %v354 = vadd.f32 %v232, %v353
        %355 = vmatmul.f32.gmra.mxu0 %v292
        %v356 = vpop.f32.mrf.mxu0
        %v357 = vadd.f32 %v232, %v356
        %358 = vmatmul.f32.gmra.mxu0 %v295
        %v359 = vpop.f32.mrf.mxu0
        %v360 = vadd.f32 %v232, %v359
        %361 = vmatmul.f32.gmra.mxu0 %v298
        %v362 = vpop.f32.mrf.mxu0
        %v363 = vadd.f32 %v232, %v362
        %364 = vmatmul.f32.gmra.mxu0 %v301
        %v365 = vpop.f32.mrf.mxu0
        %v366 = vadd.f32 %v232, %v365
        %367 = vmatmul.f32.gmra.mxu0 %v304
        %v368 = vpop.f32.mrf.mxu0
        %v369 = vadd.f32 %v232, %v368
        %370 = vmatmul.f32.gmra.mxu0 %v307
        %v371 = vpop.f32.mrf.mxu0
        %v372 = vadd.f32 %v232, %v371
        %373 = vmatmul.f32.gmra.mxu0 %v310
        %v374 = vpop.f32.mrf.mxu0
        %v375 = vadd.f32 %v232, %v374
        %376 = vmatmul.f32.gmra.mxu0 %v313
        %v377 = vpop.f32.mrf.mxu0
        %v378 = vadd.f32 %v232, %v377
        %379 = vdwg.mxu0
        %380 = vst [vmem:[%s224] sm:$0xff] %v333
        %381 = vst [vmem:[%s224 + $0x8] sm:$0xff] %v336
        %382 = vst [vmem:[%s224 + $0x10] sm:$0xff] %v339
        %383 = vst [vmem:[%s224 + $0x18] sm:$0xff] %v342
        %384 = vst [vmem:[%s224 + $0x20] sm:$0xff] %v345
        %385 = vst [vmem:[%s224 + $0x28] sm:$0xff] %v348
        %386 = vst [vmem:[%s224 + $0x30] sm:$0xff] %v351
        %387 = vst [vmem:[%s224 + $0x38] sm:$0xff] %v354
        %388 = vst [vmem:[%s224 + $0x40] sm:$0xff] %v357
        %389 = vst [vmem:[%s224 + $0x48] sm:$0xff] %v360
        %390 = vst [vmem:[%s224 + $0x50] sm:$0xff] %v363
        %391 = vst [vmem:[%s224 + $0x58] sm:$0xff] %v366
        %392 = vst [vmem:[%s224 + $0x60] sm:$0xff] %v369
        %393 = vst [vmem:[%s224 + $0x68] sm:$0xff] %v372
        %394 = vst [vmem:[%s224 + $0x70] sm:$0xff] %v375
        %395 = vst [vmem:[%s224 + $0x78] sm:$0xff] %v378
        %s396 = sand.u32 %s113, 1
        %s397 = scalar_lea.sflag [#allocation4], %s396
        %s398 = sand.u32 %s113, 1
        %s399 = smul.addr %s398, 128
        %s400 = scalar_lea.vmem [#allocation7], %s399
        // Predicated region
        $region41: #{tpu_custom_call.1} parent=31 // pred_check
          %p401 = pneg %p123
        $region42: #{tpu_custom_call.1} parent=31 // pred_check_branch
          %403 = sbr.rel (%p401) target = $region44
        $region43: #{tpu_custom_call.1} parent=31 // pred_region
          %s404 = smul.u32 16, %s26
          %406 = vsyncadd %s397, 0
          %s407 = smul.addr %s25, 32
          %s408 = sadd.s32 %s404, %s407
          %s409 = smul.addr %s408, 8
          %s410 = scalar_lea.hbm %s3, %s409
          %s411 = sshll.u32 %s400, 4
          %s412 = int_to_ptr.vmem [resolvable:$true] %s411
          %s413 = sshll.u32 %s410, 4
          %s414 = int_to_ptr.hbm [resolvable:$true] %s413
          %419 = dma.vmem_to_hbm [thread:$0]  %s412, 2048, %s414, %s397, 128, 128, 8
        $region44: #{tpu_custom_call.1} parent=31 // pred_fallthru
          _
      $region32: #{tpu_custom_call.1} parent=5 // pred_fallthru
        _
      %p420 = scmp.le.s32.totalorder 2, %s16
      // Predicated region
      $region45: #{tpu_custom_call.1} parent=5 // pred_check
        %p421 = pneg %p420
      $region46: #{tpu_custom_call.1} parent=5 // pred_check_branch
        %423 = sbr.rel (%p421) target = $region48
      $region47: #{tpu_custom_call.1} parent=5 // pred_region
        %s424 = ssub.s32 %s16, 2
        // Predicated region
        $region49: #{tpu_custom_call.1} parent=47 // pred_check
          %p425 = pneg %p129
        $region50: #{tpu_custom_call.1} parent=47 // pred_check_branch
          %427 = sbr.rel (%p425) target = $region52
        $region51: #{tpu_custom_call.1} parent=47 // pred_region
          %s428 = sand.u32 %s114, 1
          %s429 = scalar_lea.sflag [#allocation4], %s428
          %s430 = sand.u32 %s114, 1
          %s431 = smul.addr %s430, 128
          %s432 = scalar_lea.vmem [#allocation7], %s431
          %434 = dma.done %s429, 2048
        $region52: #{tpu_custom_call.1} parent=47 // pred_fallthru
          _
      $region48: #{tpu_custom_call.1} parent=5 // pred_fallthru
        _
    $region6: #{tpu_custom_call.1} parent=1 // loop_footer
      %s20 = sadd.s32 1, %s16
    $region7: #{tpu_custom_call.1} parent=1 // loop_footer_branch
      %15 = sbr.rel target = $region3
    $region8: #{tpu_custom_call.1} parent=1 // loop_exit
      _
    %435 = vsyncpa [#allocation3], 1
    %s436 = scalar_lea.sflag [#allocation3], 1
    %437 = vsyncpa %s436, 1
    %438 = vsyncpa [#allocation6], 1
    %439 = vsyncpa [#allocation4], 1
    %s440 = scalar_lea.sflag [#allocation4], 1
    %441 = vsyncpa %s440, 1

</llo_original>
